<compile_context>
chip_gen: v6e
topology: v6e:2x2x1
jax: 0.10.0
libtpu: 0.0.40
codegen_flags: <defaults>
</compile_context>

<pallas_src>
import functools

import jax
import jax.numpy as jnp
from jax.experimental import pallas as pl
from jax.experimental.pallas import tpu as pltpu


def _round_up(x: int, m: int) -> int:
    return ((x + m - 1) // m) * m


def _make_mlp_kernel(num_linear: int):
    """Fused-MLP kernel body for `num_linear` Linear layers.

    Layout: activations are [features, batch_tile]; weights are torch-native
    [out, in] (bf16); biases are [out, 1] (f32).
    """

    def kernel(*refs):
        x_ref = refs[0]
        o_ref = refs[-1]
        wb_refs = refs[1:-1]  # [w0, b0, w1, b1, ...]

        h = x_ref[...]  # bf16 [c_in, tile_n]
        for i in range(num_linear):
            w = wb_refs[2 * i][...]      # bf16 [out, in]  (converted once in wrapper)
            b = wb_refs[2 * i + 1][...]  # f32  [out, 1]
            # MXU matmul, f32 accumulation; batch dim = MXU N dim (lane-dense).
            h = jnp.dot(w, h, preferred_element_type=jnp.float32) + b
            if i < num_linear - 1:
                # SiLU(x) = x * sigmoid(x), computed in f32 (sigmoid -> EUP).
                h = h * jax.nn.sigmoid(h)
                # bf16 operand for the next MXU matmul.
                h = h.astype(jnp.bfloat16)
        o_ref[...] = h.astype(o_ref.dtype)

    return kernel


def init_mlp_params(key, c_in: int, hidden_dims: list, c_out: int):
    """PyTorch-like init. Returns flat list [w0, b0, w1, b1, ...] with
    torch-native W: [out, in] and b: [out]."""
    dims = [c_in] + list(hidden_dims) + [c_out]
    params_flat = []
    for i in range(len(dims) - 1):
        fan_in, fan_out = dims[i], dims[i + 1]
        key, kw, kb = jax.random.split(key, 3)
        bound = 1.0 / (fan_in ** 0.5)
        w = jax.random.uniform(kw, (fan_out, fan_in), jnp.float32, -bound, bound)
        b = jax.random.uniform(kb, (fan_out,), jnp.float32, -bound, bound)
        params_flat.extend([w, b])
    return params_flat


@functools.partial(jax.jit, static_argnames=("tile_n",))
def mlp_pallas(x, params_flat, tile_n: int = 8192):
    """Fused MLP. x: [N, c_in]; params_flat: [w0, b0, ...] (W: [out, in], b: [out])."""
    N, c_in = x.shape
    num_linear = len(params_flat) // 2
    c_out = params_flat[-2].shape[0]

    # Adaptive, lane-dense tile: multiple of 128, no bigger than needed for N.
    tile_n = max(128, min(_round_up(tile_n, 128), _round_up(N, 128)))
    N_pad = _round_up(N, tile_n)

    # Batch on the lane axis; bf16 streaming; pad N up to the tile size.
    # (Wrapper-side transpose/cast is layout plumbing to present lane-dense slabs.)
    xT = x.T.astype(jnp.bfloat16)                 # [c_in, N]
    if N_pad != N:
        xT = jnp.pad(xT, ((0, 0), (0, N_pad - N)))

    # One-time dtype/shape conversion of the (constant, VMEM-resident) params.
    kernel_params = []
    for i in range(num_linear):
        w = params_flat[2 * i].astype(jnp.bfloat16)                    # [out, in]
        b = params_flat[2 * i + 1].astype(jnp.float32).reshape(-1, 1)  # [out, 1]
        kernel_params.extend([w, b])

    kernel = _make_mlp_kernel(num_linear)

    # x / out tiled over the batch (lane) axis; params passed whole with a
    # constant index_map so Pallas keeps them resident across the grid.
    # TODO(synk): if v7x profiles show exposed DMA, add
    #   pipeline_mode=pl.Buffered(3) to the x BlockSpec.
    in_specs = [pl.BlockSpec((c_in, tile_n), lambda i: (0, i))]
    for p in kernel_params:
        in_specs.append(pl.BlockSpec(p.shape, lambda i: (0, 0)))
    out_spec = pl.BlockSpec((c_out, tile_n), lambda i: (0, i))

    # Advisory cost estimate (helps XLA scheduling around the custom call).
    dims = [c_in] + [params_flat[2 * i].shape[0] for i in range(num_linear)]
    flops = 2 * N_pad * sum(dims[i] * dims[i + 1] for i in range(num_linear))
    transcendentals = N_pad * sum(dims[1:-1])  # one exp per hidden activation
    bytes_accessed = (
        xT.size * xT.dtype.itemsize
        + N_pad * c_out * x.dtype.itemsize
        + sum(int(p.size) * p.dtype.itemsize for p in kernel_params)
    )

    outT = pl.pallas_call(
        kernel,
        out_shape=jax.ShapeDtypeStruct((c_out, N_pad), x.dtype),
        grid_spec=pltpu.PrefetchScalarGridSpec(
            num_scalar_prefetch=0,
            grid=(N_pad // tile_n,),
            in_specs=in_specs,
            out_specs=out_spec,
        ),
        compiler_params=pltpu.CompilerParams(
            dimension_semantics=("parallel",),
        ),
        cost_estimate=pl.CostEstimate(
            flops=int(flops),
            transcendentals=int(transcendentals),
            bytes_accessed=int(bytes_accessed),
        ),
    )(xT, *kernel_params)

    return outT[:, :N].T  # back to [N, c_out]


def mlp_reference(x, params_flat):
    """Pure-JAX reference mirroring the kernel's math (bf16 matmul operands,
    f32 accumulation / bias / SiLU), matching torch MLP forward structure."""
    num_linear = len(params_flat) // 2
    h = x.T.astype(jnp.bfloat16)
    for i in range(num_linear):
        w = params_flat[2 * i].astype(jnp.bfloat16)
        b = params_flat[2 * i + 1].astype(jnp.float32).reshape(-1, 1)
        h = jnp.dot(w, h, preferred_element_type=jnp.float32) + b
        if i < num_linear - 1:
            h = h * jax.nn.sigmoid(h)
            h = h.astype(jnp.bfloat16)
    return h.T.astype(x.dtype)


if __name__ == "__main__":
    key = jax.random.PRNGKey(0)

    # MLP(c_in=16, hidden_dims=[32, 32], c_out=8); batch not a multiple of the
    # tile to exercise the padding path and a 2-step (megacore-friendly) grid.
    c_in, hidden_dims, c_out = 16, [32, 32], 8
    N = 300

    kx, kp = jax.random.split(key)
    x = jax.random.normal(kx, (N, c_in), dtype=jnp.float32)
    params_flat = init_mlp_params(kp, c_in, hidden_dims, c_out)

    out = mlp_pallas(x, params_flat, tile_n=256)   # 2 grid steps, padded tail
    out = jax.block_until_ready(out)

    ref = mlp_reference(x, params_flat)
    assert out.shape == (N, c_out), out.shape
    assert jnp.allclose(out, ref, atol=5e-3, rtol=5e-3), "mismatch vs reference"

    # Also exercise the no-hidden-layer (single Linear) path + adaptive tile clamp.
    params_single = init_mlp_params(kp, c_in, [], c_out)
    out1 = jax.block_until_ready(mlp_pallas(x, params_single))  # default tile, clamped
    ref1 = mlp_reference(x, params_single)
    assert out1.shape == (N, c_out), out1.shape
    assert jnp.allclose(out1, ref1, atol=5e-3, rtol=5e-3), "mismatch (single linear)"

    print("KERNEL_OK")
</pallas_src>

<mosaic_0001>
module attributes {stable_mosaic.version = 11 : i64} {
  func.func @kernel(%arg0: i32, %arg1: memref<16x256xbf16, #tpu.memory_space<vmem>>, %arg2: memref<32x16xbf16, #tpu.memory_space<vmem>>, %arg3: memref<32x1xf32, #tpu.memory_space<vmem>>, %arg4: memref<32x32xbf16, #tpu.memory_space<vmem>>, %arg5: memref<32x1xf32, #tpu.memory_space<vmem>>, %arg6: memref<8x32xbf16, #tpu.memory_space<vmem>>, %arg7: memref<8x1xf32, #tpu.memory_space<vmem>>, %arg8: memref<8x256xf32, #tpu.memory_space<vmem>>) attributes {dimension_semantics = [#tpu.dimension_semantics<parallel>], iteration_bounds = array<i64: 2>, scalar_prefetch = 0 : i64, scratch_operands = 0 : i64, tpu.core_type = #tpu.core_type<tc>, window_params = [{transform_indices = @transform_0, window_bounds = array<i64: 16, 256>}, {pipeline_mode = #tpu.pipeline_mode<synchronous>, transform_indices = @transform_1, window_bounds = array<i64: 32, 16>}, {pipeline_mode = #tpu.pipeline_mode<synchronous>, transform_indices = @transform_2, window_bounds = array<i64: 32, 1>}, {pipeline_mode = #tpu.pipeline_mode<synchronous>, transform_indices = @transform_3, window_bounds = array<i64: 32, 32>}, {pipeline_mode = #tpu.pipeline_mode<synchronous>, transform_indices = @transform_4, window_bounds = array<i64: 32, 1>}, {pipeline_mode = #tpu.pipeline_mode<synchronous>, transform_indices = @transform_5, window_bounds = array<i64: 8, 32>}, {pipeline_mode = #tpu.pipeline_mode<synchronous>, transform_indices = @transform_6, window_bounds = array<i64: 8, 1>}, {transform_indices = @transform_7, window_bounds = array<i64: 8, 256>}]} {
    %c0 = arith.constant 0 : index
    %c0_0 = arith.constant 0 : index
    %0 = vector.load %arg1[%c0, %c0_0] : memref<16x256xbf16, #tpu.memory_space<vmem>>, vector<16x256xbf16>
    %c0_1 = arith.constant 0 : index
    %c0_2 = arith.constant 0 : index
    %1 = vector.load %arg2[%c0_1, %c0_2] : memref<32x16xbf16, #tpu.memory_space<vmem>>, vector<32x16xbf16>
    %c0_3 = arith.constant 0 : index
    %c0_4 = arith.constant 0 : index
    %2 = vector.load %arg3[%c0_3, %c0_4] : memref<32x1xf32, #tpu.memory_space<vmem>>, vector<32x1xf32>
    %cst = arith.constant dense<0.000000e+00> : vector<32x256xf32>
    %3 = tpu.matmul %1, %0, %cst {dimension_numbers = #tpu.dot_dimension_numbers<[1], [0], [0], [1], [0, 0, 1, 1], [], []>} : vector<32x16xbf16>, vector<16x256xbf16>, vector<32x256xf32> -> vector<32x256xf32>
    %4 = vector.broadcast %2 : vector<32x1xf32> to vector<32x256xf32>
    %5 = arith.addf %3, %4 : vector<32x256xf32>
    %6 = arith.negf %5 : vector<32x256xf32>
    %7 = math.exp %6 : vector<32x256xf32>
    %cst_5 = arith.constant 1.000000e+00 : f32
    %8 = vector.broadcast %cst_5 : f32 to vector<32x256xf32>
    %9 = arith.addf %8, %7 : vector<32x256xf32>
    %10 = arith.divf %8, %9 : vector<32x256xf32>
    %11 = arith.mulf %5, %10 : vector<32x256xf32>
    %12 = arith.truncf %11 : vector<32x256xf32> to vector<32x256xbf16>
    %c0_6 = arith.constant 0 : index
    %c0_7 = arith.constant 0 : index
    %13 = vector.load %arg4[%c0_6, %c0_7] : memref<32x32xbf16, #tpu.memory_space<vmem>>, vector<32x32xbf16>
    %c0_8 = arith.constant 0 : index
    %c0_9 = arith.constant 0 : index
    %14 = vector.load %arg5[%c0_8, %c0_9] : memref<32x1xf32, #tpu.memory_space<vmem>>, vector<32x1xf32>
    %cst_10 = arith.constant dense<0.000000e+00> : vector<32x256xf32>
    %15 = tpu.matmul %13, %12, %cst_10 {dimension_numbers = #tpu.dot_dimension_numbers<[1], [0], [0], [1], [0, 0, 1, 1], [], []>} : vector<32x32xbf16>, vector<32x256xbf16>, vector<32x256xf32> -> vector<32x256xf32>
    %16 = vector.broadcast %14 : vector<32x1xf32> to vector<32x256xf32>
    %17 = arith.addf %15, %16 : vector<32x256xf32>
    %18 = arith.negf %17 : vector<32x256xf32>
    %19 = math.exp %18 : vector<32x256xf32>
    %cst_11 = arith.constant 1.000000e+00 : f32
    %20 = vector.broadcast %cst_11 : f32 to vector<32x256xf32>
    %21 = arith.addf %20, %19 : vector<32x256xf32>
    %22 = arith.divf %20, %21 : vector<32x256xf32>
    %23 = arith.mulf %17, %22 : vector<32x256xf32>
    %24 = arith.truncf %23 : vector<32x256xf32> to vector<32x256xbf16>
    %c0_12 = arith.constant 0 : index
    %c0_13 = arith.constant 0 : index
    %25 = vector.load %arg6[%c0_12, %c0_13] : memref<8x32xbf16, #tpu.memory_space<vmem>>, vector<8x32xbf16>
    %c0_14 = arith.constant 0 : index
    %c0_15 = arith.constant 0 : index
    %26 = vector.load %arg7[%c0_14, %c0_15] : memref<8x1xf32, #tpu.memory_space<vmem>>, vector<8x1xf32>
    %cst_16 = arith.constant dense<0.000000e+00> : vector<8x256xf32>
    %27 = tpu.matmul %25, %24, %cst_16 {dimension_numbers = #tpu.dot_dimension_numbers<[1], [0], [0], [1], [0, 0, 1, 1], [], []>} : vector<8x32xbf16>, vector<32x256xbf16>, vector<8x256xf32> -> vector<8x256xf32>
    %28 = vector.broadcast %26 : vector<8x1xf32> to vector<8x256xf32>
    %29 = arith.addf %27, %28 : vector<8x256xf32>
    %c0_17 = arith.constant 0 : index
    %c0_18 = arith.constant 0 : index
    %30 = vector.load %arg8[%c0_17, %c0_18] : memref<8x256xf32, #tpu.memory_space<vmem>>, vector<8x256xf32>
    tpu.vector_store %arg8[%c0_17, %c0_18], %29 {strides = array<i32>} : memref<8x256xf32, #tpu.memory_space<vmem>>, vector<8x256xf32>,
    return
  }
  func.func @transform_0(%arg0: i32) -> (i32, i32) {
    %c0_i32 = arith.constant 0 : i32
    %c0_i32_0 = arith.constant 0 : i32
    return %c0_i32, %arg0 : i32, i32
  }
  func.func @transform_1(%arg0: i32) -> (i32, i32) {
    %c0_i32 = arith.constant 0 : i32
    %c0_i32_0 = arith.constant 0 : i32
    %c0_i32_1 = arith.constant 0 : i32
    return %c0_i32, %c0_i32_0 : i32, i32
  }
  func.func @transform_2(%arg0: i32) -> (i32, i32) {
    %c0_i32 = arith.constant 0 : i32
    %c0_i32_0 = arith.constant 0 : i32
    %c0_i32_1 = arith.constant 0 : i32
    return %c0_i32, %c0_i32_0 : i32, i32
  }
  func.func @transform_3(%arg0: i32) -> (i32, i32) {
    %c0_i32 = arith.constant 0 : i32
    %c0_i32_0 = arith.constant 0 : i32
    %c0_i32_1 = arith.constant 0 : i32
    return %c0_i32, %c0_i32_0 : i32, i32
  }
  func.func @transform_4(%arg0: i32) -> (i32, i32) {
    %c0_i32 = arith.constant 0 : i32
    %c0_i32_0 = arith.constant 0 : i32
    %c0_i32_1 = arith.constant 0 : i32
    return %c0_i32, %c0_i32_0 : i32, i32
  }
  func.func @transform_5(%arg0: i32) -> (i32, i32) {
    %c0_i32 = arith.constant 0 : i32
    %c0_i32_0 = arith.constant 0 : i32
    %c0_i32_1 = arith.constant 0 : i32
    return %c0_i32, %c0_i32_0 : i32, i32
  }
  func.func @transform_6(%arg0: i32) -> (i32, i32) {
    %c0_i32 = arith.constant 0 : i32
    %c0_i32_0 = arith.constant 0 : i32
    %c0_i32_1 = arith.constant 0 : i32
    return %c0_i32, %c0_i32_0 : i32, i32
  }
  func.func @transform_7(%arg0: i32) -> (i32, i32) {
    %c0_i32 = arith.constant 0 : i32
    %c0_i32_0 = arith.constant 0 : i32
    return %c0_i32, %arg0 : i32, i32
  }
}

</mosaic_0001>

<llo_original>
// kernel: mlp_pallas.1
$region0: #{mlp_pallas.1}
  #allocation0 [shape = 'u32[]', space=smem, size = 0x4, offset = 0x4, fixed_abs, tag = 'smem constant byte address 0x4 - core index']
  #allocation1 [shape = 'u32[144,128]{1,0:T(1,128)}', space=vmem, size = 0x12000, scoped, tag = 'internal scratch']
  %s0 = inlined_call_operand.vmem [shape: bf16[16,512], index: 0, kind: input, shape index: {}]
  %s1 = inlined_call_operand.vmem [shape: bf16[32,16], index: 1, kind: input, shape index: {}]
  %s2 = inlined_call_operand.vmem [shape: f32[32,1], index: 2, kind: input, shape index: {}]
  %s3 = inlined_call_operand.vmem [shape: bf16[32,32], index: 3, kind: input, shape index: {}]
  %s4 = inlined_call_operand.vmem [shape: f32[32,1], index: 4, kind: input, shape index: {}]
  %s5 = inlined_call_operand.vmem [shape: bf16[8,32], index: 5, kind: input, shape index: {}]
  %s6 = inlined_call_operand.vmem [shape: f32[8,1], index: 6, kind: input, shape index: {}]
  %s7 = inlined_call_operand.vmem [shape: f32[8,512], index: 7, kind: output, shape index: {}]
  %s8 = sld [smem:[#allocation0]]
  $region99: #{mlp_pallas.1} parent=0
    _
  %s10 = ssub.s32 1, %s8
  %s11 = scalar_select 0, %s10, %s8
  $region1: #{mlp_pallas.1} parent=0
    #allocation2 [shape = 'u8[16384]{0}', space=vmem, size = 0x4000, scoped, tag = 'input window, operand 0']
    loop: start=0, step=1, limit=4
    $region2: #{mlp_pallas.1} parent=1 // loop_pre_header
      _
    $region3: #{mlp_pallas.1} parent=1 // loop_header
      %s13 = sphi 0, %s17
      %p14 = scmp.ge.s32.totalorder %s13, 4
      %s23 = sphi 0, %s25
      %s26 = sphi 0, %s23
      %s27 = sphi 0, %s26
      %s43 = sphi 0, %s27
      %s47 = sphi 0, %s47
      %s49 = sphi 0, %s47
      %s50 = sphi 0, %s49
      %s64 = sphi 0, %s50
      %s68 = sphi 0, %s68
      %s70 = sphi 0, %s68
      %s71 = sphi 0, %s70
      %s85 = sphi 0, %s71
      %s89 = sphi 0, %s89
      %s91 = sphi 0, %s89
      %s92 = sphi 0, %s91
      %s106 = sphi 0, %s92
      %s110 = sphi 0, %s110
      %s112 = sphi 0, %s110
      %s113 = sphi 0, %s112
      %s127 = sphi 0, %s113
      %s131 = sphi 0, %s131
      %s133 = sphi 0, %s131
      %s134 = sphi 0, %s133
      %s148 = sphi 0, %s134
      %s152 = sphi 0, %s152
      %s154 = sphi 0, %s152
      %s155 = sphi 0, %s154
      %s169 = sphi 0, %s155
      %s175 = sphi 0, %s177
      %s178 = sphi 0, %s175
      %s179 = sphi 0, %s178
      %s195 = sphi 0, %s179
    $region4: #{mlp_pallas.1} parent=1 // loop_header_branch
      %16 = sbr.rel (%p14) target = $region8
    $region5: #{mlp_pallas.1} parent=1 // loop_body
      %s18 = ssub.s32 %s13, 1
      %s19 = ssub.s32 %s13, 2
      %s20 = sadd.s32 %s13, 1
      %s21 = ssub.s32 %s13, %s20
      %p22 = scmp.eq.s32.totalorder %s21, 0
      %s24 = sadd.s32 %s23, 1
      %s25 = scalar_select %p22, %s23, %s24
      %p28 = pneg %p22
      %p29 = scmp.eq.s32.totalorder %s13, 1
      %p30 = por %p28, %p29
      %p31 = scmp.ne.s32.totalorder %s23, %s26
      %p32 = scmp.eq.s32.totalorder %s13, 0
      %p33 = por %p31, %p32
      %p34 = scmp.ne.s32.totalorder %s23, %s26
      %p35 = scmp.eq.s32.totalorder %s18, 1
      %p36 = por %p34, %p35
      %p37 = scmp.ne.s32.totalorder %s26, %s27
      %p38 = scmp.eq.s32.totalorder %s18, 0
      %p39 = por %p37, %p38
      %p40 = scmp.ne.s32.totalorder %s26, %s27
      %p41 = scmp.eq.s32.totalorder %s19, 1
      %p42 = por %p40, %p41
      %p44 = scmp.ne.s32.totalorder %s27, %s43
      %p45 = scmp.eq.s32.totalorder %s19, 0
      %p46 = por %p44, %p45
      %s48 = sadd.s32 %s47, 1
      %p51 = scmp.eq.s32.totalorder %s13, 1
      %p52 = scmp.ne.s32.totalorder %s47, %s49
      %p53 = scmp.eq.s32.totalorder %s13, 0
      %p54 = por %p52, %p53
      %p55 = scmp.ne.s32.totalorder %s47, %s49
      %p56 = scmp.eq.s32.totalorder %s18, 1
      %p57 = por %p55, %p56
      %p58 = scmp.ne.s32.totalorder %s49, %s50
      %p59 = scmp.eq.s32.totalorder %s18, 0
      %p60 = por %p58, %p59
      %p61 = scmp.ne.s32.totalorder %s49, %s50
      %p62 = scmp.eq.s32.totalorder %s19, 1
      %p63 = por %p61, %p62
      %p65 = scmp.ne.s32.totalorder %s50, %s64
      %p66 = scmp.eq.s32.totalorder %s19, 0
      %p67 = por %p65, %p66
      %s69 = sadd.s32 %s68, 1
      %p72 = scmp.eq.s32.totalorder %s13, 1
      %p73 = scmp.ne.s32.totalorder %s68, %s70
      %p74 = scmp.eq.s32.totalorder %s13, 0
      %p75 = por %p73, %p74
      %p76 = scmp.ne.s32.totalorder %s68, %s70
      %p77 = scmp.eq.s32.totalorder %s18, 1
      %p78 = por %p76, %p77
      %p79 = scmp.ne.s32.totalorder %s70, %s71
      %p80 = scmp.eq.s32.totalorder %s18, 0
      %p81 = por %p79, %p80
      %p82 = scmp.ne.s32.totalorder %s70, %s71
      %p83 = scmp.eq.s32.totalorder %s19, 1
      %p84 = por %p82, %p83
      %p86 = scmp.ne.s32.totalorder %s71, %s85
      %p87 = scmp.eq.s32.totalorder %s19, 0
      %p88 = por %p86, %p87
      %s90 = sadd.s32 %s89, 1
      %p93 = scmp.eq.s32.totalorder %s13, 1
      %p94 = scmp.ne.s32.totalorder %s89, %s91
      %p95 = scmp.eq.s32.totalorder %s13, 0
      %p96 = por %p94, %p95
      %p97 = scmp.ne.s32.totalorder %s89, %s91
      %p98 = scmp.eq.s32.totalorder %s18, 1
      %p99 = por %p97, %p98
      %p100 = scmp.ne.s32.totalorder %s91, %s92
      %p101 = scmp.eq.s32.totalorder %s18, 0
      %p102 = por %p100, %p101
      %p103 = scmp.ne.s32.totalorder %s91, %s92
      %p104 = scmp.eq.s32.totalorder %s19, 1
      %p105 = por %p103, %p104
      %p107 = scmp.ne.s32.totalorder %s92, %s106
      %p108 = scmp.eq.s32.totalorder %s19, 0
      %p109 = por %p107, %p108
      %s111 = sadd.s32 %s110, 1
      %p114 = scmp.eq.s32.totalorder %s13, 1
      %p115 = scmp.ne.s32.totalorder %s110, %s112
      %p116 = scmp.eq.s32.totalorder %s13, 0
      %p117 = por %p115, %p116
      %p118 = scmp.ne.s32.totalorder %s110, %s112
      %p119 = scmp.eq.s32.totalorder %s18, 1
      %p120 = por %p118, %p119
      %p121 = scmp.ne.s32.totalorder %s112, %s113
      %p122 = scmp.eq.s32.totalorder %s18, 0
      %p123 = por %p121, %p122
      %p124 = scmp.ne.s32.totalorder %s112, %s113
      %p125 = scmp.eq.s32.totalorder %s19, 1
      %p126 = por %p124, %p125
      %p128 = scmp.ne.s32.totalorder %s113, %s127
      %p129 = scmp.eq.s32.totalorder %s19, 0
      %p130 = por %p128, %p129
      %s132 = sadd.s32 %s131, 1
      %p135 = scmp.eq.s32.totalorder %s13, 1
      %p136 = scmp.ne.s32.totalorder %s131, %s133
      %p137 = scmp.eq.s32.totalorder %s13, 0
      %p138 = por %p136, %p137
      %p139 = scmp.ne.s32.totalorder %s131, %s133
      %p140 = scmp.eq.s32.totalorder %s18, 1
      %p141 = por %p139, %p140
      %p142 = scmp.ne.s32.totalorder %s133, %s134
      %p143 = scmp.eq.s32.totalorder %s18, 0
      %p144 = por %p142, %p143
      %p145 = scmp.ne.s32.totalorder %s133, %s134
      %p146 = scmp.eq.s32.totalorder %s19, 1
      %p147 = por %p145, %p146
      %p149 = scmp.ne.s32.totalorder %s134, %s148
      %p150 = scmp.eq.s32.totalorder %s19, 0
      %p151 = por %p149, %p150
      %s153 = sadd.s32 %s152, 1
      %p156 = scmp.eq.s32.totalorder %s13, 1
      %p157 = scmp.ne.s32.totalorder %s152, %s154
      %p158 = scmp.eq.s32.totalorder %s13, 0
      %p159 = por %p157, %p158
      %p160 = scmp.ne.s32.totalorder %s152, %s154
      %p161 = scmp.eq.s32.totalorder %s18, 1
      %p162 = por %p160, %p161
      %p163 = scmp.ne.s32.totalorder %s154, %s155
      %p164 = scmp.eq.s32.totalorder %s18, 0
      %p165 = por %p163, %p164
      %p166 = scmp.ne.s32.totalorder %s154, %s155
      %p167 = scmp.eq.s32.totalorder %s19, 1
      %p168 = por %p166, %p167
      %p170 = scmp.ne.s32.totalorder %s155, %s169
      %p171 = scmp.eq.s32.totalorder %s19, 0
      %p172 = por %p170, %p171
      %s173 = ssub.s32 %s13, %s20
      %p174 = scmp.eq.s32.totalorder %s173, 0
      %s176 = sadd.s32 %s175, 1
      %s177 = scalar_select %p174, %s175, %s176
      %p180 = pneg %p174
      %p181 = scmp.eq.s32.totalorder %s13, 1
      %p182 = por %p180, %p181
      %p183 = scmp.ne.s32.totalorder %s175, %s178
      %p184 = scmp.eq.s32.totalorder %s13, 0
      %p185 = por %p183, %p184
      %p186 = scmp.ne.s32.totalorder %s175, %s178
      %p187 = scmp.eq.s32.totalorder %s18, 1
      %p188 = por %p186, %p187
      %p189 = scmp.ne.s32.totalorder %s178, %s179
      %p190 = scmp.eq.s32.totalorder %s18, 0
      %p191 = por %p189, %p190
      %p192 = scmp.ne.s32.totalorder %s178, %s179
      %p193 = scmp.eq.s32.totalorder %s19, 1
      %p194 = por %p192, %p193
      %p196 = scmp.ne.s32.totalorder %s179, %s195
      %p197 = scmp.eq.s32.totalorder %s19, 0
      %p198 = por %p196, %p197
      %p199 = scmp.le.s32.totalorder 1, %s13
      %p200 = scmp.lt.s32.totalorder %s13, 3
      %p201 = pnand %p199, %p200
      %p202 = pneg %p201
      // Predicated region
      $region9: #{mlp_pallas.1} parent=5 // pred_check
        _
      $region10: #{mlp_pallas.1} parent=5 // pred_check_branch
        %204 = sbr.rel (%p201) target = $region12
      $region11: #{mlp_pallas.1} parent=5 // pred_region
        %s205 = ssub.s32 %s13, 1
        // Predicated region
        $region13: #{mlp_pallas.1} parent=11 // pred_check
          %p206 = pneg %p60
        $region14: #{mlp_pallas.1} parent=11 // pred_check_branch
          %208 = sbr.rel (%p206) target = $region16
        $region15: #{mlp_pallas.1} parent=11 // pred_region
          _
        $region16: #{mlp_pallas.1} parent=11 // pred_fallthru
          _
        // Predicated region
        $region17: #{mlp_pallas.1} parent=11 // pred_check
          %p209 = pneg %p81
        $region18: #{mlp_pallas.1} parent=11 // pred_check_branch
          %211 = sbr.rel (%p209) target = $region20
        $region19: #{mlp_pallas.1} parent=11 // pred_region
          _
        $region20: #{mlp_pallas.1} parent=11 // pred_fallthru
          _
        // Predicated region
        $region21: #{mlp_pallas.1} parent=11 // pred_check
          %p212 = pneg %p102
        $region22: #{mlp_pallas.1} parent=11 // pred_check_branch
          %214 = sbr.rel (%p212) target = $region24
        $region23: #{mlp_pallas.1} parent=11 // pred_region
          _
        $region24: #{mlp_pallas.1} parent=11 // pred_fallthru
          _
        // Predicated region
        $region25: #{mlp_pallas.1} parent=11 // pred_check
          %p215 = pneg %p123
        $region26: #{mlp_pallas.1} parent=11 // pred_check_branch
          %217 = sbr.rel (%p215) target = $region28
        $region27: #{mlp_pallas.1} parent=11 // pred_region
          _
        $region28: #{mlp_pallas.1} parent=11 // pred_fallthru
          _
        // Predicated region
        $region29: #{mlp_pallas.1} parent=11 // pred_check
          %p218 = pneg %p144
        $region30: #{mlp_pallas.1} parent=11 // pred_check_branch
          %220 = sbr.rel (%p218) target = $region32
        $region31: #{mlp_pallas.1} parent=11 // pred_region
          _
        $region32: #{mlp_pallas.1} parent=11 // pred_fallthru
          _
        // Predicated region
        $region33: #{mlp_pallas.1} parent=11 // pred_check
          %p221 = pneg %p165
        $region34: #{mlp_pallas.1} parent=11 // pred_check_branch
          %223 = sbr.rel (%p221) target = $region36
        $region35: #{mlp_pallas.1} parent=11 // pred_region
          _
        $region36: #{mlp_pallas.1} parent=11 // pred_fallthru
          _
      $region12: #{mlp_pallas.1} parent=5 // pred_fallthru
        _
      %p224 = scmp.lt.s32.totalorder %s13, 2
      // Predicated region
      $region37: #{mlp_pallas.1} parent=5 // pred_check
        %p225 = pneg %p224
      $region38: #{mlp_pallas.1} parent=5 // pred_check_branch
        %227 = sbr.rel (%p225) target = $region40
      $region39: #{mlp_pallas.1} parent=5 // pred_region
        // Predicated region
        $region41: #{mlp_pallas.1} parent=39 // pred_check
          %p228 = pneg %p33
        $region42: #{mlp_pallas.1} parent=39 // pred_check_branch
          %230 = sbr.rel (%p228) target = $region44
        $region43: #{mlp_pallas.1} parent=39 // pred_region
          %s231 = sand.u32 %s23, 1
          %s232 = sand.u32 %s23, 1
          %s233 = smul.addr %s232, 16
          %s234 = scalar_lea.vmem [#allocation2], %s233
          %s235 = smul.u32 2, %s13
          %s236 = smul.addr %s235, 4
          %s237 = scalar_lea.vmem %s0, %s236
          // Predicated region
          $region45: #{mlp_pallas.1} parent=43 // pred_check
            _
          $region46: #{mlp_pallas.1} parent=43 // pred_check_branch
            %239 = sbr.rel (0) target = $region48
          $region47: #{mlp_pallas.1} parent=43 // pred_region
            // Predicated region
            $region49: #{mlp_pallas.1} parent=47 // pred_check
              _
            $region50: #{mlp_pallas.1} parent=47 // pred_check_branch
              %241 = sbr.rel (0) target = $region52
            $region51: #{mlp_pallas.1} parent=47 // pred_region
              // Predicated region
              $region64: #{mlp_pallas.1} parent=51 // pred_check
                _
              $region65: #{mlp_pallas.1} parent=51 // pred_check_branch
                %259 = sbr.rel (0) target = $region67
              $region66: #{mlp_pallas.1} parent=51 // pred_region
                loop: start=0, step=1, limit=1
                $region68: #{mlp_pallas.1} parent=66 // loop_pre_header
                  _
                $region69: #{mlp_pallas.1} parent=66 // loop_header
                  %s261 = sphi 0, %s265
                  %p262 = scmp.ge.s32.totalorder %s261, 1
                  %s266 = sphi %s237, %s237
                  %s267 = sphi %s234, %s234
                $region70: #{mlp_pallas.1} parent=66 // loop_header_branch
                  %264 = sbr.rel (%p262) target = $region74
                $region71: #{mlp_pallas.1} parent=66 // loop_body
                  %v268 = vld [vmem:[%s266] sm:$0xff]
                  %269 = vst [vmem:[%s267] sm:$0xff] %v268
                  %v270 = vld [vmem:[%s266 + $0x10] sm:$0xff]
                  %271 = vst [vmem:[%s267 + $0x8] sm:$0xff] %v270
                $region72: #{mlp_pallas.1} parent=66 // loop_footer
                  %s265 = sadd.s32 1, %s261
                $region73: #{mlp_pallas.1} parent=66 // loop_footer_branch
                  %260 = sbr.rel target = $region69
                $region74: #{mlp_pallas.1} parent=66 // loop_exit
                  _
              $region67: #{mlp_pallas.1} parent=51 // pred_fallthru
                _
              // Predicated region
              $region75: #{mlp_pallas.1} parent=51 // pred_check
                _
              $region76: #{mlp_pallas.1} parent=51 // pred_check_branch
                %273 = sbr.rel target = $region78
              $region77: #{mlp_pallas.1} parent=51 // pred_region
                _
              $region78: #{mlp_pallas.1} parent=51 // pred_fallthru
                _
            $region52: #{mlp_pallas.1} parent=47 // pred_fallthru
              _
            // Predicated region
            $region53: #{mlp_pallas.1} parent=47 // pred_check
              _
            $region54: #{mlp_pallas.1} parent=47 // pred_check_branch
              %243 = sbr.rel target = $region56
            $region55: #{mlp_pallas.1} parent=47 // pred_region
              %s245 = ssub.s32 256, 1
              loop: start=0, step=1, limit=1
              $region57: #{mlp_pallas.1} parent=55 // loop_pre_header
                _
              $region58: #{mlp_pallas.1} parent=55 // loop_header
                %s247 = sphi 0, %s251
                %p248 = scmp.ge.s32.totalorder %s247, 1
                %s252 = sphi %s237, %s237
                %s253 = sphi %s234, %s234
              $region59: #{mlp_pallas.1} parent=55 // loop_header_branch
                %250 = sbr.rel (%p248) target = $region63
              $region60: #{mlp_pallas.1} parent=55 // loop_body
                %v254 = vld [vmem:[%s252] sm:%s245]
                %255 = vst [vmem:[%s253] sm:%s245] %v254
                %v256 = vld [vmem:[%s252 + $0x10] sm:%s245]
                %257 = vst [vmem:[%s253 + $0x8] sm:%s245] %v256
              $region61: #{mlp_pallas.1} parent=55 // loop_footer
                %s251 = sadd.s32 1, %s247
              $region62: #{mlp_pallas.1} parent=55 // loop_footer_branch
                %246 = sbr.rel target = $region58
              $region63: #{mlp_pallas.1} parent=55 // loop_exit
                _
            $region56: #{mlp_pallas.1} parent=47 // pred_fallthru
              _
          $region48: #{mlp_pallas.1} parent=43 // pred_fallthru
            _
          %274 = vnop
        $region44: #{mlp_pallas.1} parent=39 // pred_fallthru
          _
      $region40: #{mlp_pallas.1} parent=5 // pred_fallthru
        _
      %p275 = scmp.le.s32.totalorder 1, %s13
      %p276 = scmp.lt.s32.totalorder %s13, 3
      %p277 = pnand %p275, %p276
      %p278 = pneg %p277
      // Predicated region
      $region79: #{mlp_pallas.1} parent=5 // pred_check
        _
      $region80: #{mlp_pallas.1} parent=5 // pred_check_branch
        %280 = sbr.rel (%p277) target = $region82
      $region81: #{mlp_pallas.1} parent=5 // pred_region
        %s281 = ssub.s32 %s13, 1
        %s282 = sand.u32 %s26, 1
        %s283 = sand.u32 %s26, 1
        %s284 = smul.addr %s283, 16
        %s285 = scalar_lea.vmem [#allocation2], %s284
        // Predicated region
        $region83: #{mlp_pallas.1} parent=81 // pred_check
          %p286 = pneg %p39
        $region84: #{mlp_pallas.1} parent=81 // pred_check_branch
          %288 = sbr.rel (%p286) target = $region86
        $region85: #{mlp_pallas.1} parent=81 // pred_region
          _
        $region86: #{mlp_pallas.1} parent=81 // pred_fallthru
          _
        %s289 = sand.u32 %s26, 1
        %s290 = sand.u32 %s26, 1
        %s291 = smul.addr %s290, 16
        %s292 = scalar_lea.vmem [#allocation2], %s291
        %p293 = pneg %p39
        %p294 = pneg %p36
        %p295 = pneg %p60
        %p296 = pneg %p57
        %p297 = pneg %p81
        %p298 = pneg %p78
        %p299 = pneg %p102
        %p300 = pneg %p99
        %p301 = pneg %p123
        %p302 = pneg %p120
        %p303 = pneg %p144
        %p304 = pneg %p141
        %p305 = pneg %p165
        %p306 = pneg %p162
        %p307 = pneg %p191
        %p308 = pneg %p188
        %s309 = smul.u32 2, %s18
        %p310 = scmp.lt.s32.totalorder %s309, 3
        %s311 = scalar_select %p310, %s309, 3
        %s312 = smul.addr %s311, 8
        %s313 = scalar_lea.vmem %s7, %s312
        %s314 = smul.u32 2, %s18
        %s315 = smul.u32 2, %s18
        %p316 = scmp.lt.s32.totalorder %s315, 3
        %s317 = scalar_select %p316, %s315, 3
        %s318 = smul.addr %s317, 8
        %s319 = scalar_lea.vmem %s7, %s318
        %s320 = smul.u32 2, %s18
        %v322 = vld [vmem:[%s285] sm:$0xff]
        %v323 = vld [vmem:[%s285 + $0x8] sm:$0xff]
        %v324 = vld [vmem:[%s1] sm:$0xf]
        %v325 = vld [vmem:[%s1 + $0x4] sm:$0xf]
        %v326 = vld [vmem:[%s1 + $0x8] sm:$0xf]
        %v327 = vld [vmem:[%s1 + $0xc] sm:$0xf]
        %v328 = vld [vmem:[%s2] sm:$0xff]
        %v329 = vld [vmem:[%s2 + $0x8] sm:$0xff]
        %v330 = vld [vmem:[%s2 + $0x10] sm:$0xff]
        %v331 = vld [vmem:[%s2 + $0x18] sm:$0xff]
        %333 = vset.pattern.permute.xlu0 0
        %334 = vperm.xlu0 %333, %v328
        %v335 = vpop.permute.xlu0 %334
        %338 = vset.pattern.permute.xlu0 0
        %339 = vperm.xlu0 %338, %v329
        %v340 = vpop.permute.xlu0 %339
        %343 = vset.pattern.permute.xlu0 0
        %344 = vperm.xlu0 %343, %v330
        %v345 = vpop.permute.xlu0 %344
        %348 = vset.pattern.permute.xlu0 0
        %349 = vperm.xlu0 %348, %v331
        %v350 = vpop.permute.xlu0 %349
        %v356 = vunpack.c.l.b16 %v324
        %v357 = vunpack.c.l.b16 %v325
        %v358 = vunpack.c.l.b16 %v326
        %v359 = vunpack.c.l.b16 %v327
        %v360 = vpack.c.b16 %v357, %v356
        %v361 = vpack.c.b16 %v359, %v358
        %v364 = vunpack.c.l.b16 %v322
        %v365 = vunpack.c.h.b16 %v322
        %v366 = vunpack.c.l.b16 %v323
        %v367 = vunpack.c.h.b16 %v323
        %v368 = vpack.c.b16 %v366, %v364
        %v369 = vpack.c.b16 %v367, %v365
        %vm372 = vcmask 130048
        %v374 = vsel %vm372, %v360, 0
        %v377 = vsel %vm372, %v361, 0
        %379 = vmatprep.subr.bf16.mxu0 0
        %380 = vmatpush1.bf16.msra.mxu0 0
        %381 = vmatprep.subr.bf16.mxu0 0
        %382 = vmatpush1.bf16.msra.mxu0 0
        %383 = vmatprep.subr.bf16.mxu0 0
        %384 = vmatpush1.bf16.msra.mxu0 0
        %385 = vmatprep.subr.bf16.mxu0 0
        %386 = vmatpush1.bf16.msra.mxu0 0
        %387 = vmatprep.subr.bf16.mxu0 0
        %388 = vmatpush1.bf16.msra.mxu0 0
        %389 = vmatprep.subr.bf16.mxu0 0
        %390 = vmatpush1.bf16.msra.mxu0 0
        %391 = vmatprep.subr.bf16.mxu0 0
        %392 = vmatpush1.bf16.msra.mxu0 0
        %393 = vmatprep.subr.bf16.mxu0 %v369
        %394 = vmatpush1.bf16.msra.mxu0 %v368
        %395 = vmatprep.subr.bf16.mxu0 0
        %396 = vmatpush2.bf16.msra.mxu0 0
        %397 = vmatprep.subr.bf16.mxu0 0
        %398 = vmatpush2.bf16.msra.mxu0 0
        %399 = vmatprep.subr.bf16.mxu0 0
        %400 = vmatpush2.bf16.msra.mxu0 0
        %401 = vmatprep.subr.bf16.mxu0 0
        %402 = vmatpush2.bf16.msra.mxu0 0
        %403 = vmatprep.subr.bf16.mxu0 0
        %404 = vmatpush2.bf16.msra.mxu0 0
        %405 = vmatprep.subr.bf16.mxu0 0
        %406 = vmatpush2.bf16.msra.mxu0 0
        %407 = vmatprep.subr.bf16.mxu0 0
        %408 = vmatpush2.bf16.msra.mxu0 0
        %409 = vmatprep.subr.bf16.mxu0 0
        %410 = vmatpush2.bf16.msra.mxu0 0
        %411 = vmatprep.mubr.bf16.mxu0 0
        %412 = vmatmul.mubr.bf16.gmra.mxu0 %v374
        %v413 = vpop.f32.mrf.mxu0
        %v414 = vadd.f32 %v335, %v413
        %v415 = vpop.f32.mrf.mxu0
        %v416 = vadd.f32 %v335, %v415
        %v417 = vpop.f32.mrf.mxu0
        %v418 = vadd.f32 %v340, %v417
        %v419 = vpop.f32.mrf.mxu0
        %v420 = vadd.f32 %v340, %v419
        %421 = vmatprep.mubr.bf16.mxu0 0
        %422 = vmatmul.mubr.bf16.gmra.mxu0 %v377
        %v423 = vpop.f32.mrf.mxu0
        %v424 = vadd.f32 %v345, %v423
        %v425 = vpop.f32.mrf.mxu0
        %v426 = vadd.f32 %v345, %v425
        %v427 = vpop.f32.mrf.mxu0
        %v428 = vadd.f32 %v350, %v427
        %v429 = vpop.f32.mrf.mxu0
        %v430 = vadd.f32 %v350, %v429
        %431 = vdwg.mxu0
        %v432 = vxor.u32 %v414, 2147483648
        %v433 = vxor.u32 %v416, 2147483648
        %v434 = vxor.u32 %v418, 2147483648
        %v435 = vxor.u32 %v420, 2147483648
        %v436 = vxor.u32 %v424, 2147483648
        %v437 = vxor.u32 %v426, 2147483648
        %v438 = vxor.u32 %v428, 2147483648
        %v439 = vxor.u32 %v430, 2147483648
        %v440 = vmul.f32 %v432, 1.442695
        %v441 = vpow.pop %v440
        %v442 = vmul.f32 %v433, 1.442695
        %v443 = vpow.pop %v442
        %v444 = vmul.f32 %v434, 1.442695
        %v445 = vpow.pop %v444
        %v446 = vmul.f32 %v435, 1.442695
        %v447 = vpow.pop %v446
        %v448 = vmul.f32 %v436, 1.442695
        %v449 = vpow.pop %v448
        %v450 = vmul.f32 %v437, 1.442695
        %v451 = vpow.pop %v450
        %v452 = vmul.f32 %v438, 1.442695
        %v453 = vpow.pop %v452
        %v454 = vmul.f32 %v439, 1.442695
        %v455 = vpow.pop %v454
        %v456 = vadd.f32 %v441, 1.0
        %v457 = vadd.f32 %v443, 1.0
        %v458 = vadd.f32 %v445, 1.0
        %v459 = vadd.f32 %v447, 1.0
        %v460 = vadd.f32 %v449, 1.0
        %v461 = vadd.f32 %v451, 1.0
        %v462 = vadd.f32 %v453, 1.0
        %v463 = vadd.f32 %v455, 1.0
        %v464 = vrcp.pop %v456
        %v465 = vmul.f32 1.0, %v464
        %v466 = vrcp.pop %v457
        %v467 = vmul.f32 1.0, %v466
        %v468 = vrcp.pop %v458
        %v469 = vmul.f32 1.0, %v468
        %v470 = vrcp.pop %v459
        %v471 = vmul.f32 1.0, %v470
        %v472 = vrcp.pop %v460
        %v473 = vmul.f32 1.0, %v472
        %v474 = vrcp.pop %v461
        %v475 = vmul.f32 1.0, %v474
        %v476 = vrcp.pop %v462
        %v477 = vmul.f32 1.0, %v476
        %v478 = vrcp.pop %v463
        %v479 = vmul.f32 1.0, %v478
        %v480 = vmul.f32 %v414, %v465
        %v481 = vmul.f32 %v416, %v467
        %v482 = vmul.f32 %v418, %v469
        %v483 = vmul.f32 %v420, %v471
        %v484 = vmul.f32 %v424, %v473
        %v485 = vmul.f32 %v426, %v475
        %v486 = vmul.f32 %v428, %v477
        %v487 = vmul.f32 %v430, %v479
        %v488 = vpack.c.bf16 %v482, %v480
        %v489 = vpack.c.bf16 %v483, %v481
        %v490 = vpack.c.bf16 %v486, %v484
        %v491 = vpack.c.bf16 %v487, %v485
        %v492 = vld [vmem:[%s3] sm:$0xf]
        %v493 = vld [vmem:[%s3 + $0x4] sm:$0xf]
        %v494 = vld [vmem:[%s3 + $0x8] sm:$0xf]
        %v495 = vld [vmem:[%s3 + $0xc] sm:$0xf]
        %v496 = vld [vmem:[%s4] sm:$0xff]
        %v497 = vld [vmem:[%s4 + $0x8] sm:$0xff]
        %v498 = vld [vmem:[%s4 + $0x10] sm:$0xff]
        %v499 = vld [vmem:[%s4 + $0x18] sm:$0xff]
        %501 = vset.pattern.permute.xlu0 0
        %502 = vperm.xlu0 %501, %v496
        %v503 = vpop.permute.xlu0 %502
        %506 = vset.pattern.permute.xlu0 0
        %507 = vperm.xlu0 %506, %v497
        %v508 = vpop.permute.xlu0 %507
        %511 = vset.pattern.permute.xlu0 0
        %512 = vperm.xlu0 %511, %v498
        %v513 = vpop.permute.xlu0 %512
        %516 = vset.pattern.permute.xlu0 0
        %517 = vperm.xlu0 %516, %v499
        %v518 = vpop.permute.xlu0 %517
        %v524 = vunpack.c.l.b16 %v492
        %v525 = vunpack.c.l.b16 %v493
        %v526 = vunpack.c.l.b16 %v494
        %v527 = vunpack.c.l.b16 %v495
        %v528 = vpack.c.b16 %v525, %v524
        %v529 = vpack.c.b16 %v527, %v526
        %vm530 = vcmask 261120
        %v532 = vsel %vm530, %v528, 0
        %v535 = vsel %vm530, %v529, 0
        %537 = vmatprep.subr.bf16.mxu0 0
        %538 = vmatpush1.bf16.msra.mxu0 0
        %539 = vmatprep.subr.bf16.mxu0 0
        %540 = vmatpush1.bf16.msra.mxu0 0
        %541 = vmatprep.subr.bf16.mxu0 0
        %542 = vmatpush1.bf16.msra.mxu0 0
        %543 = vmatprep.subr.bf16.mxu0 0
        %544 = vmatpush1.bf16.msra.mxu0 0
        %545 = vmatprep.subr.bf16.mxu0 0
        %546 = vmatpush1.bf16.msra.mxu0 0
        %547 = vmatprep.subr.bf16.mxu0 0
        %548 = vmatpush1.bf16.msra.mxu0 0
        %549 = vmatprep.subr.bf16.mxu0 %v491
        %550 = vmatpush1.bf16.msra.mxu0 %v490
        %551 = vmatprep.subr.bf16.mxu0 %v489
        %552 = vmatpush1.bf16.msra.mxu0 %v488
        %553 = vmatprep.subr.bf16.mxu0 0
        %554 = vmatpush2.bf16.msra.mxu0 0
        %555 = vmatprep.subr.bf16.mxu0 0
        %556 = vmatpush2.bf16.msra.mxu0 0
        %557 = vmatprep.subr.bf16.mxu0 0
        %558 = vmatpush2.bf16.msra.mxu0 0
        %559 = vmatprep.subr.bf16.mxu0 0
        %560 = vmatpush2.bf16.msra.mxu0 0
        %561 = vmatprep.subr.bf16.mxu0 0
        %562 = vmatpush2.bf16.msra.mxu0 0
        %563 = vmatprep.subr.bf16.mxu0 0
        %564 = vmatpush2.bf16.msra.mxu0 0
        %565 = vmatprep.subr.bf16.mxu0 0
        %566 = vmatpush2.bf16.msra.mxu0 0
        %567 = vmatprep.subr.bf16.mxu0 0
        %568 = vmatpush2.bf16.msra.mxu0 0
        %569 = vmatprep.mubr.bf16.mxu0 0
        %570 = vmatmul.mubr.bf16.gmra.mxu0 %v532
        %v571 = vpop.f32.mrf.mxu0
        %v572 = vadd.f32 %v503, %v571
        %v573 = vpop.f32.mrf.mxu0
        %v574 = vadd.f32 %v503, %v573
        %v575 = vpop.f32.mrf.mxu0
        %v576 = vadd.f32 %v508, %v575
        %v577 = vpop.f32.mrf.mxu0
        %v578 = vadd.f32 %v508, %v577
        %579 = vmatprep.mubr.bf16.mxu0 0
        %580 = vmatmul.mubr.bf16.gmra.mxu0 %v535
        %v581 = vpop.f32.mrf.mxu0
        %v582 = vadd.f32 %v513, %v581
        %v583 = vpop.f32.mrf.mxu0
        %v584 = vadd.f32 %v513, %v583
        %v585 = vpop.f32.mrf.mxu0
        %v586 = vadd.f32 %v518, %v585
        %v587 = vpop.f32.mrf.mxu0
        %v588 = vadd.f32 %v518, %v587
        %589 = vdwg.mxu0
        %v590 = vxor.u32 %v572, 2147483648
        %v591 = vxor.u32 %v574, 2147483648
        %v592 = vxor.u32 %v576, 2147483648
        %v593 = vxor.u32 %v578, 2147483648
        %v594 = vxor.u32 %v582, 2147483648
        %v595 = vxor.u32 %v584, 2147483648
        %v596 = vxor.u32 %v586, 2147483648
        %v597 = vxor.u32 %v588, 2147483648
        %v598 = vmul.f32 %v590, 1.442695
        %v599 = vpow.pop %v598
        %v600 = vmul.f32 %v591, 1.442695
        %v601 = vpow.pop %v600
        %v602 = vmul.f32 %v592, 1.442695
        %v603 = vpow.pop %v602
        %v604 = vmul.f32 %v593, 1.442695
        %v605 = vpow.pop %v604
        %v606 = vmul.f32 %v594, 1.442695
        %v607 = vpow.pop %v606
        %v608 = vmul.f32 %v595, 1.442695
        %v609 = vpow.pop %v608
        %v610 = vmul.f32 %v596, 1.442695
        %v611 = vpow.pop %v610
        %v612 = vmul.f32 %v597, 1.442695
        %v613 = vpow.pop %v612
        %v614 = vadd.f32 %v599, 1.0
        %v615 = vadd.f32 %v601, 1.0
        %v616 = vadd.f32 %v603, 1.0
        %v617 = vadd.f32 %v605, 1.0
        %v618 = vadd.f32 %v607, 1.0
        %v619 = vadd.f32 %v609, 1.0
        %v620 = vadd.f32 %v611, 1.0
        %v621 = vadd.f32 %v613, 1.0
        %v622 = vrcp.pop %v614
        %v623 = vmul.f32 1.0, %v622
        %v624 = vrcp.pop %v615
        %v625 = vmul.f32 1.0, %v624
        %v626 = vrcp.pop %v616
        %v627 = vmul.f32 1.0, %v626
        %v628 = vrcp.pop %v617
        %v629 = vmul.f32 1.0, %v628
        %v630 = vrcp.pop %v618
        %v631 = vmul.f32 1.0, %v630
        %v632 = vrcp.pop %v619
        %v633 = vmul.f32 1.0, %v632
        %v634 = vrcp.pop %v620
        %v635 = vmul.f32 1.0, %v634
        %v636 = vrcp.pop %v621
        %v637 = vmul.f32 1.0, %v636
        %v638 = vmul.f32 %v572, %v623
        %v639 = vmul.f32 %v574, %v625
        %v640 = vmul.f32 %v576, %v627
        %v641 = vmul.f32 %v578, %v629
        %v642 = vmul.f32 %v582, %v631
        %v643 = vmul.f32 %v584, %v633
        %v644 = vmul.f32 %v586, %v635
        %v645 = vmul.f32 %v588, %v637
        %v646 = vpack.c.bf16 %v640, %v638
        %v647 = vpack.c.bf16 %v641, %v639
        %v648 = vpack.c.bf16 %v644, %v642
        %v649 = vpack.c.bf16 %v645, %v643
        %v650 = vld [vmem:[%s5] sm:$0xf]
        %v651 = vld [vmem:[%s6] sm:$0xff]
        %653 = vset.pattern.permute.xlu0 0
        %654 = vperm.xlu0 %653, %v651
        %v655 = vpop.permute.xlu0 %654
        %v658 = vsel %vm530, %v650, 0
        %660 = vmatprep.subr.bf16.mxu0 0
        %661 = vmatpush1.bf16.msra.mxu0 0
        %662 = vmatprep.subr.bf16.mxu0 0
        %663 = vmatpush1.bf16.msra.mxu0 0
        %664 = vmatprep.subr.bf16.mxu0 0
        %665 = vmatpush1.bf16.msra.mxu0 0
        %666 = vmatprep.subr.bf16.mxu0 0
        %667 = vmatpush1.bf16.msra.mxu0 0
        %668 = vmatprep.subr.bf16.mxu0 0
        %669 = vmatpush1.bf16.msra.mxu0 0
        %670 = vmatprep.subr.bf16.mxu0 0
        %671 = vmatpush1.bf16.msra.mxu0 0
        %672 = vmatprep.subr.bf16.mxu0 %v649
        %673 = vmatpush1.bf16.msra.mxu0 %v648
        %674 = vmatprep.subr.bf16.mxu0 %v647
        %675 = vmatpush1.bf16.msra.mxu0 %v646
        %676 = vmatprep.subr.bf16.mxu0 0
        %677 = vmatpush2.bf16.msra.mxu0 0
        %678 = vmatprep.subr.bf16.mxu0 0
        %679 = vmatpush2.bf16.msra.mxu0 0
        %680 = vmatprep.subr.bf16.mxu0 0
        %681 = vmatpush2.bf16.msra.mxu0 0
        %682 = vmatprep.subr.bf16.mxu0 0
        %683 = vmatpush2.bf16.msra.mxu0 0
        %684 = vmatprep.subr.bf16.mxu0 0
        %685 = vmatpush2.bf16.msra.mxu0 0
        %686 = vmatprep.subr.bf16.mxu0 0
        %687 = vmatpush2.bf16.msra.mxu0 0
        %688 = vmatprep.subr.bf16.mxu0 0
        %689 = vmatpush2.bf16.msra.mxu0 0
        %690 = vmatprep.subr.bf16.mxu0 0
        %691 = vmatpush2.bf16.msra.mxu0 0
        %692 = vmatprep.mubr.bf16.mxu0 0
        %693 = vmatmul.mubr.bf16.gmra.mxu0 %v658
        %v694 = vpop.f32.mrf.mxu0
        %v695 = vadd.f32 %v655, %v694
        %v696 = vpop.f32.mrf.mxu0
        %v697 = vadd.f32 %v655, %v696
        %v698 = vpop.f32.mrf.mxu0
        %v699 = vpop.f32.mrf.mxu0
        %700 = vdwg.mxu0
        %701 = vst [vmem:[%s319] sm:$0xff] %v695
        %702 = vst [vmem:[%s319 + $0x8] sm:$0xff] %v697
        %s703 = smul.u32 2, %s18
        %p704 = scmp.lt.s32.totalorder %s703, 3
        %s705 = scalar_select %p704, %s703, 3
        %s706 = smul.addr %s705, 8
        %s707 = scalar_lea.vmem %s7, %s706
        // Predicated region
        $region87: #{mlp_pallas.1} parent=81 // pred_check
          %p708 = pneg %p188
        $region88: #{mlp_pallas.1} parent=81 // pred_check_branch
          %710 = sbr.rel (%p708) target = $region90
        $region89: #{mlp_pallas.1} parent=81 // pred_region
          %s711 = smul.u32 2, %s18
        $region90: #{mlp_pallas.1} parent=81 // pred_fallthru
          _
      $region82: #{mlp_pallas.1} parent=5 // pred_fallthru
        _
      %p712 = scmp.le.s32.totalorder 2, %s13
      // Predicated region
      $region91: #{mlp_pallas.1} parent=5 // pred_check
        %p713 = pneg %p712
      $region92: #{mlp_pallas.1} parent=5 // pred_check_branch
        %715 = sbr.rel (%p713) target = $region94
      $region93: #{mlp_pallas.1} parent=5 // pred_region
        %s716 = ssub.s32 %s13, 2
        // Predicated region
        $region95: #{mlp_pallas.1} parent=93 // pred_check
          %p717 = pneg %p194
        $region96: #{mlp_pallas.1} parent=93 // pred_check_branch
          %719 = sbr.rel (%p717) target = $region98
        $region97: #{mlp_pallas.1} parent=93 // pred_region
          %s720 = smul.u32 2, %s19
          %p721 = scmp.lt.s32.totalorder %s720, 3
          %s722 = scalar_select %p721, %s720, 3
          %s723 = smul.addr %s722, 8
          %s724 = scalar_lea.vmem %s7, %s723
        $region98: #{mlp_pallas.1} parent=93 // pred_fallthru
          _
      $region94: #{mlp_pallas.1} parent=5 // pred_fallthru
        _
    $region6: #{mlp_pallas.1} parent=1 // loop_footer
      %s17 = sadd.s32 1, %s13
    $region7: #{mlp_pallas.1} parent=1 // loop_footer_branch
      %12 = sbr.rel target = $region3
    $region8: #{mlp_pallas.1} parent=1 // loop_exit
      _

</llo_original>
